<compile_context>
chip_gen: v7x
topology: tpu7x:2x2x1
jax: 0.10.0
libtpu: 0.0.40
codegen_flags: <defaults>
</compile_context>

<pallas_src>
import jax
import jax.numpy as jnp
from jax.experimental import pallas as pl
from jax.experimental.pallas import tpu as pltpu


def _round_up(n, m):
    return ((n + m - 1) // m) * m


def mlp_kernel(xt_ref, w1_ref, b1_ref, w2_ref, b2_ref, w3_ref, b3_ref, o_ref):
    # xt_ref: [in, TM] bf16 (batch on lanes). Weights bf16, biases f32 [out, 1].
    xt = xt_ref[...]                                                   # bf16

    h1 = jnp.dot(w1_ref[...], xt, preferred_element_type=jnp.float32)  # [8, TM] f32
    h1 = jnp.maximum(h1 + b1_ref[...], 0.0)

    h2 = jnp.dot(w2_ref[...], h1.astype(jnp.bfloat16),
                 preferred_element_type=jnp.float32)                   # [4, TM] f32
    h2 = jnp.maximum(h2 + b2_ref[...], 0.0)

    h3 = jnp.dot(w3_ref[...], h2.astype(jnp.bfloat16),
                 preferred_element_type=jnp.float32)                   # [nc, TM] f32
    o_ref[...] = (h3 + b3_ref[...]).astype(o_ref.dtype)


def symptom_disease_forward(x, params, *, tm=1024):
    """x: [B, input_size]. params: PyTorch-convention weights (w: [out, in])."""
    w1, b1 = params["w1"], params["b1"]   # [8, in],  [8]
    w2, b2 = params["w2"], params["b2"]   # [4, 8],   [4]
    w3, b3 = params["w3"], params["b3"]   # [nc, 4],  [nc]

    B, input_size = x.shape
    num_classes = w3.shape[0]

    # Lane tile: multiple of 128; cap at `tm` (sized well within v7x VMEM).
    TM = min(tm, _round_up(max(B, 1), 128))
    B_pad = _round_up(B, TM)

    # Layout/dtype plumbing (outside the kernel): bf16 stream, pad, transpose.
    x_bf = x.astype(jnp.bfloat16)
    if B_pad != B:
        x_bf = jnp.pad(x_bf, ((0, B_pad - B), (0, 0)))
    x_t = x_bf.T                                   # [in, B_pad], batch on lanes

    w1_bf = w1.astype(jnp.bfloat16)                # [8, in]
    w2_bf = w2.astype(jnp.bfloat16)                # [4, 8]
    w3_bf = w3.astype(jnp.bfloat16)                # [nc, 4]
    b1_c = b1.reshape(-1, 1).astype(jnp.float32)   # [8, 1]
    b2_c = b2.reshape(-1, 1).astype(jnp.float32)   # [4, 1]
    b3_c = b3.reshape(-1, 1).astype(jnp.float32)   # [nc, 1]

    grid = (B_pad // TM,)

    flops = 2 * B_pad * (input_size * 8 + 8 * 4 + 4 * num_classes)
    bytes_accessed = (
        x_t.size * 2 + B_pad * num_classes * 4
        + (w1.size + w2.size + w3.size) * 2
        + (b1.size + b2.size + b3.size) * 4
    )

    out_t = pl.pallas_call(
        mlp_kernel,
        out_shape=jax.ShapeDtypeStruct((num_classes, B_pad), jnp.float32),
        grid=grid,
        in_specs=[
            pl.BlockSpec((input_size, TM), lambda i: (0, i)),       # x^T (streamed)
            pl.BlockSpec((8, input_size), lambda i: (0, 0)),        # w1 (resident)
            pl.BlockSpec((8, 1), lambda i: (0, 0)),                 # b1
            pl.BlockSpec((4, 8), lambda i: (0, 0)),                 # w2
            pl.BlockSpec((4, 1), lambda i: (0, 0)),                 # b2
            pl.BlockSpec((num_classes, 4), lambda i: (0, 0)),       # w3
            pl.BlockSpec((num_classes, 1), lambda i: (0, 0)),       # b3
        ],
        out_specs=pl.BlockSpec((num_classes, TM), lambda i: (0, i)),
        compiler_params=pltpu.CompilerParams(
            dimension_semantics=("parallel",),
        ),
        cost_estimate=pl.CostEstimate(
            flops=flops, transcendentals=0, bytes_accessed=bytes_accessed),
    )(x_t, w1_bf, b1_c, w2_bf, b2_c, w3_bf, b3_c)

    return out_t.T[:B]                              # back to [B, num_classes]


def init_params(key, input_size, num_classes):
    """Deterministic init mimicking PyTorch nn.Linear default U(-1/sqrt(in), 1/sqrt(in))."""
    def linear_init(k, fan_in, fan_out):
        kw, kb = jax.random.split(k)
        bound = 1.0 / (fan_in ** 0.5)
        w = jax.random.uniform(kw, (fan_out, fan_in), jnp.float32, -bound, bound)
        b = jax.random.uniform(kb, (fan_out,), jnp.float32, -bound, bound)
        return w, b

    k1, k2, k3 = jax.random.split(key, 3)
    w1, b1 = linear_init(k1, input_size, 8)
    w2, b2 = linear_init(k2, 8, 4)
    w3, b3 = linear_init(k3, 4, num_classes)
    return {"w1": w1, "b1": b1, "w2": w2, "b2": b2, "w3": w3, "b3": b3}


def reference_forward(x, params):
    """Pure-JAX reference mirroring the kernel's bf16-operand / f32-accumulate math."""
    def bf(a):
        return a.astype(jnp.bfloat16).astype(jnp.float32)
    h = jnp.maximum(bf(x) @ bf(params["w1"]).T + params["b1"], 0.0)
    h = jnp.maximum(bf(h) @ bf(params["w2"]).T + params["b2"], 0.0)
    return bf(h) @ bf(params["w3"]).T + params["b3"]


if __name__ == "__main__":
    input_size = 32     # number of symptom features
    num_classes = 16    # number of diseases
    batch = 8

    key = jax.random.PRNGKey(0)
    k_x, k_p = jax.random.split(key)
    # Binary-ish symptom vectors (exactly representable in bf16).
    x = (jax.random.uniform(k_x, (batch, input_size), jnp.float32) > 0.5).astype(
        jnp.float32)
    params = init_params(k_p, input_size, num_classes)

    out = symptom_disease_forward(x, params)
    out = jax.block_until_ready(out)

    ref = reference_forward(x, params)
    assert out.shape == (batch, num_classes)
    assert jnp.allclose(out, ref, atol=1e-3, rtol=1e-3), float(
        jnp.max(jnp.abs(out - ref)))

    print("KERNEL_OK")
</pallas_src>

<mosaic_0001>
module attributes {stable_mosaic.version = 11 : i64} {
  func.func @mlp_kernel(%arg0: i32, %arg1: memref<32x128xbf16, #tpu.memory_space<vmem>>, %arg2: memref<8x32xbf16, #tpu.memory_space<vmem>>, %arg3: memref<8x1xf32, #tpu.memory_space<vmem>>, %arg4: memref<4x8xbf16, #tpu.memory_space<vmem>>, %arg5: memref<4x1xf32, #tpu.memory_space<vmem>>, %arg6: memref<16x4xbf16, #tpu.memory_space<vmem>>, %arg7: memref<16x1xf32, #tpu.memory_space<vmem>>, %arg8: memref<16x128xf32, #tpu.memory_space<vmem>>) attributes {dimension_semantics = [#tpu.dimension_semantics<parallel>], iteration_bounds = array<i64: 1>, scalar_prefetch = 0 : i64, scratch_operands = 0 : i64, tpu.core_type = #tpu.core_type<tc>, window_params = [{transform_indices = @transform_0, window_bounds = array<i64: 32, 128>}, {pipeline_mode = #tpu.pipeline_mode<synchronous>, transform_indices = @transform_1, window_bounds = array<i64: 8, 32>}, {pipeline_mode = #tpu.pipeline_mode<synchronous>, transform_indices = @transform_2, window_bounds = array<i64: 8, 1>}, {pipeline_mode = #tpu.pipeline_mode<synchronous>, transform_indices = @transform_3, window_bounds = array<i64: 4, 8>}, {pipeline_mode = #tpu.pipeline_mode<synchronous>, transform_indices = @transform_4, window_bounds = array<i64: 4, 1>}, {pipeline_mode = #tpu.pipeline_mode<synchronous>, transform_indices = @transform_5, window_bounds = array<i64: 16, 4>}, {pipeline_mode = #tpu.pipeline_mode<synchronous>, transform_indices = @transform_6, window_bounds = array<i64: 16, 1>}, {transform_indices = @transform_7, window_bounds = array<i64: 16, 128>}]} {
    %c0 = arith.constant 0 : index
    %c0_0 = arith.constant 0 : index
    %0 = vector.load %arg1[%c0, %c0_0] : memref<32x128xbf16, #tpu.memory_space<vmem>>, vector<32x128xbf16>
    %c0_1 = arith.constant 0 : index
    %c0_2 = arith.constant 0 : index
    %1 = vector.load %arg2[%c0_1, %c0_2] : memref<8x32xbf16, #tpu.memory_space<vmem>>, vector<8x32xbf16>
    %cst = arith.constant dense<0.000000e+00> : vector<8x128xf32>
    %2 = tpu.matmul %1, %0, %cst {dimension_numbers = #tpu.dot_dimension_numbers<[1], [0], [0], [1], [0, 0, 1, 1], [], []>} : vector<8x32xbf16>, vector<32x128xbf16>, vector<8x128xf32> -> vector<8x128xf32>
    %c0_3 = arith.constant 0 : index
    %c0_4 = arith.constant 0 : index
    %3 = vector.load %arg3[%c0_3, %c0_4] : memref<8x1xf32, #tpu.memory_space<vmem>>, vector<8x1xf32>
    %4 = vector.broadcast %3 : vector<8x1xf32> to vector<8x128xf32>
    %5 = arith.addf %2, %4 : vector<8x128xf32>
    %cst_5 = arith.constant 0.000000e+00 : f32
    %6 = vector.broadcast %cst_5 : f32 to vector<8x128xf32>
    %7 = arith.maximumf %5, %6 : vector<8x128xf32>
    %c0_6 = arith.constant 0 : index
    %c0_7 = arith.constant 0 : index
    %8 = vector.load %arg4[%c0_6, %c0_7] : memref<4x8xbf16, #tpu.memory_space<vmem>>, vector<4x8xbf16>
    %9 = arith.truncf %7 : vector<8x128xf32> to vector<8x128xbf16>
    %cst_8 = arith.constant dense<0.000000e+00> : vector<4x128xf32>
    %10 = tpu.matmul %8, %9, %cst_8 {dimension_numbers = #tpu.dot_dimension_numbers<[1], [0], [0], [1], [0, 0, 1, 1], [], []>} : vector<4x8xbf16>, vector<8x128xbf16>, vector<4x128xf32> -> vector<4x128xf32>
    %c0_9 = arith.constant 0 : index
    %c0_10 = arith.constant 0 : index
    %11 = vector.load %arg5[%c0_9, %c0_10] : memref<4x1xf32, #tpu.memory_space<vmem>>, vector<4x1xf32>
    %12 = vector.broadcast %11 : vector<4x1xf32> to vector<4x128xf32>
    %13 = arith.addf %10, %12 : vector<4x128xf32>
    %cst_11 = arith.constant 0.000000e+00 : f32
    %14 = vector.broadcast %cst_11 : f32 to vector<4x128xf32>
    %15 = arith.maximumf %13, %14 : vector<4x128xf32>
    %c0_12 = arith.constant 0 : index
    %c0_13 = arith.constant 0 : index
    %16 = vector.load %arg6[%c0_12, %c0_13] : memref<16x4xbf16, #tpu.memory_space<vmem>>, vector<16x4xbf16>
    %17 = arith.truncf %15 : vector<4x128xf32> to vector<4x128xbf16>
    %cst_14 = arith.constant dense<0.000000e+00> : vector<16x128xf32>
    %18 = tpu.matmul %16, %17, %cst_14 {dimension_numbers = #tpu.dot_dimension_numbers<[1], [0], [0], [1], [0, 0, 1, 1], [], []>} : vector<16x4xbf16>, vector<4x128xbf16>, vector<16x128xf32> -> vector<16x128xf32>
    %c0_15 = arith.constant 0 : index
    %c0_16 = arith.constant 0 : index
    %19 = vector.load %arg7[%c0_15, %c0_16] : memref<16x1xf32, #tpu.memory_space<vmem>>, vector<16x1xf32>
    %20 = vector.broadcast %19 : vector<16x1xf32> to vector<16x128xf32>
    %21 = arith.addf %18, %20 : vector<16x128xf32>
    %c0_17 = arith.constant 0 : index
    %c0_18 = arith.constant 0 : index
    %22 = vector.load %arg8[%c0_17, %c0_18] : memref<16x128xf32, #tpu.memory_space<vmem>>, vector<16x128xf32>
    tpu.vector_store %arg8[%c0_17, %c0_18], %21 {strides = array<i32>} : memref<16x128xf32, #tpu.memory_space<vmem>>, vector<16x128xf32>,
    return
  }
  func.func @transform_0(%arg0: i32) -> (i32, i32) {
    %c0_i32 = arith.constant 0 : i32
    %c0_i32_0 = arith.constant 0 : i32
    return %c0_i32, %arg0 : i32, i32
  }
  func.func @transform_1(%arg0: i32) -> (i32, i32) {
    %c0_i32 = arith.constant 0 : i32
    %c0_i32_0 = arith.constant 0 : i32
    %c0_i32_1 = arith.constant 0 : i32
    return %c0_i32, %c0_i32_0 : i32, i32
  }
  func.func @transform_2(%arg0: i32) -> (i32, i32) {
    %c0_i32 = arith.constant 0 : i32
    %c0_i32_0 = arith.constant 0 : i32
    %c0_i32_1 = arith.constant 0 : i32
    return %c0_i32, %c0_i32_0 : i32, i32
  }
  func.func @transform_3(%arg0: i32) -> (i32, i32) {
    %c0_i32 = arith.constant 0 : i32
    %c0_i32_0 = arith.constant 0 : i32
    %c0_i32_1 = arith.constant 0 : i32
    return %c0_i32, %c0_i32_0 : i32, i32
  }
  func.func @transform_4(%arg0: i32) -> (i32, i32) {
    %c0_i32 = arith.constant 0 : i32
    %c0_i32_0 = arith.constant 0 : i32
    %c0_i32_1 = arith.constant 0 : i32
    return %c0_i32, %c0_i32_0 : i32, i32
  }
  func.func @transform_5(%arg0: i32) -> (i32, i32) {
    %c0_i32 = arith.constant 0 : i32
    %c0_i32_0 = arith.constant 0 : i32
    %c0_i32_1 = arith.constant 0 : i32
    return %c0_i32, %c0_i32_0 : i32, i32
  }
  func.func @transform_6(%arg0: i32) -> (i32, i32) {
    %c0_i32 = arith.constant 0 : i32
    %c0_i32_0 = arith.constant 0 : i32
    %c0_i32_1 = arith.constant 0 : i32
    return %c0_i32, %c0_i32_0 : i32, i32
  }
  func.func @transform_7(%arg0: i32) -> (i32, i32) {
    %c0_i32 = arith.constant 0 : i32
    %c0_i32_0 = arith.constant 0 : i32
    return %c0_i32, %arg0 : i32, i32
  }
}

</mosaic_0001>

<llo_original>
// kernel: tpu_custom_call.1
$region0: #{tpu_custom_call.1}
  #allocation0 [shape = 'u32[]', space=smem, size = 0x4, offset = 0x4, fixed_abs, tag = 'smem constant byte address 0x4 - core index']
  #allocation1 [shape = 'u32[144,128]{1,0:T(1,128)}', space=vmem, size = 0x12000, scoped, tag = 'internal scratch']
  %s0 = inlined_call_operand.vmem [shape: bf16[32,128], index: 0, kind: input, shape index: {}]
  %s1 = inlined_call_operand.vmem [shape: bf16[8,32], index: 1, kind: input, shape index: {}]
  %s2 = inlined_call_operand.vmem [shape: f32[8,1], index: 2, kind: input, shape index: {}]
  %s3 = inlined_call_operand.vmem [shape: bf16[4,8], index: 3, kind: input, shape index: {}]
  %s4 = inlined_call_operand.vmem [shape: f32[4,1], index: 4, kind: input, shape index: {}]
  %s5 = inlined_call_operand.vmem [shape: bf16[16,4], index: 5, kind: input, shape index: {}]
  %s6 = inlined_call_operand.vmem [shape: f32[16,1], index: 6, kind: input, shape index: {}]
  %s7 = inlined_call_operand.hbm [shape: f32[16,128], index: 7, kind: output, shape index: {}]
  %s8 = sld [smem:[#allocation0]]
  $region38: #{tpu_custom_call.1} parent=0
    _
  %s10 = ssub.s32 1, %s8
  %s11 = scalar_select 0, %s10, %s8
  $region1: #{tpu_custom_call.1} parent=0
    #allocation2 [shape = 'u8[8192]{0}', space=vmem, size = 0x2000, scoped, tag = 'output window, operand 0, single buffered']
    #allocation3 [shape = 's32[1]{0}', space=sflag, size = 0x4, scoped, tag = 'scoped memory for tpu_custom_call.1']
    %12 = vsyncpa [#allocation3], 0
    // Predicated region
    $region2: #{tpu_custom_call.1} parent=1 // pred_check
      _
    $region3: #{tpu_custom_call.1} parent=1 // pred_check_branch
      %14 = sbr.rel (0) target = $region5
    $region4: #{tpu_custom_call.1} parent=1 // pred_region
      _
    $region5: #{tpu_custom_call.1} parent=1 // pred_fallthru
      _
    // Predicated region
    $region6: #{tpu_custom_call.1} parent=1 // pred_check
      _
    $region7: #{tpu_custom_call.1} parent=1 // pred_check_branch
      %16 = sbr.rel (0) target = $region9
    $region8: #{tpu_custom_call.1} parent=1 // pred_region
      _
    $region9: #{tpu_custom_call.1} parent=1 // pred_fallthru
      _
    // Predicated region
    $region10: #{tpu_custom_call.1} parent=1 // pred_check
      _
    $region11: #{tpu_custom_call.1} parent=1 // pred_check_branch
      %18 = sbr.rel (0) target = $region13
    $region12: #{tpu_custom_call.1} parent=1 // pred_region
      _
    $region13: #{tpu_custom_call.1} parent=1 // pred_fallthru
      _
    // Predicated region
    $region14: #{tpu_custom_call.1} parent=1 // pred_check
      _
    $region15: #{tpu_custom_call.1} parent=1 // pred_check_branch
      %20 = sbr.rel (0) target = $region17
    $region16: #{tpu_custom_call.1} parent=1 // pred_region
      _
    $region17: #{tpu_custom_call.1} parent=1 // pred_fallthru
      _
    // Predicated region
    $region18: #{tpu_custom_call.1} parent=1 // pred_check
      _
    $region19: #{tpu_custom_call.1} parent=1 // pred_check_branch
      %22 = sbr.rel (0) target = $region21
    $region20: #{tpu_custom_call.1} parent=1 // pred_region
      _
    $region21: #{tpu_custom_call.1} parent=1 // pred_fallthru
      _
    // Predicated region
    $region22: #{tpu_custom_call.1} parent=1 // pred_check
      _
    $region23: #{tpu_custom_call.1} parent=1 // pred_check_branch
      %24 = sbr.rel (0) target = $region25
    $region24: #{tpu_custom_call.1} parent=1 // pred_region
      _
    $region25: #{tpu_custom_call.1} parent=1 // pred_fallthru
      _
    // Predicated region
    $region26: #{tpu_custom_call.1} parent=1 // pred_check
      _
    $region27: #{tpu_custom_call.1} parent=1 // pred_check_branch
      %26 = sbr.rel (0) target = $region29
    $region28: #{tpu_custom_call.1} parent=1 // pred_region
      _
    $region29: #{tpu_custom_call.1} parent=1 // pred_fallthru
      _
    %v28 = vld [vmem:[%s0] sm:$0xf]
    %v29 = vld [vmem:[%s0 + $0x4] sm:$0xf]
    %v30 = vld [vmem:[%s0 + $0x8] sm:$0xf]
    %v31 = vld [vmem:[%s0 + $0xc] sm:$0xf]
    %v32 = vld [vmem:[%s1] sm:$0xf]
    %v33 = vld [vmem:[%s2] sm:$0xff]
    %35 = vset.pattern.permute.xlu0 0
    %36 = vperm.xlu0 %35, %v33
    %v37 = vpop.permute.xlu0 %36
    %v43 = vunpack.c.l.b16 %v28
    %v44 = vunpack.c.l.b16 %v29
    %v45 = vunpack.c.l.b16 %v30
    %v46 = vunpack.c.l.b16 %v31
    %v47 = vpack.c.b16 %v44, %v43
    %v48 = vpack.c.b16 %v46, %v45
    %vm51 = vcmask 261120
    %v53 = vsel %vm51, %v32, 0
    %55 = vmatprep.subr.bf16.mxu0 0
    %56 = vmatpush1.bf16.msra.mxu0 %v47
    %57 = vmatprep.subr.bf16.mxu0 0
    %58 = vmatpush1.bf16.msra.mxu0 %v48
    %59 = vmatprep.subr.bf16.mxu0 0
    %60 = vmatpush1.bf16.msra.mxu0 0
    %61 = vmatprep.subr.bf16.mxu0 0
    %62 = vmatpush1.bf16.msra.mxu0 0
    %63 = vmatprep.subr.bf16.mxu0 0
    %64 = vmatpush1.bf16.msra.mxu0 0
    %65 = vmatprep.subr.bf16.mxu0 0
    %66 = vmatpush1.bf16.msra.mxu0 0
    %67 = vmatprep.subr.bf16.mxu0 0
    %68 = vmatpush1.bf16.msra.mxu0 0
    %69 = vmatprep.subr.bf16.mxu0 0
    %70 = vmatpush1.bf16.msra.mxu0 0
    %71 = vmatprep.subr.bf16.mxu0 0
    %72 = vmatpush1.bf16.msra.mxu0 0
    %73 = vmatprep.subr.bf16.mxu0 0
    %74 = vmatpush1.bf16.msra.mxu0 0
    %75 = vmatprep.subr.bf16.mxu0 0
    %76 = vmatpush1.bf16.msra.mxu0 0
    %77 = vmatprep.subr.bf16.mxu0 0
    %78 = vmatpush1.bf16.msra.mxu0 0
    %79 = vmatprep.subr.bf16.mxu0 0
    %80 = vmatpush1.bf16.msra.mxu0 0
    %81 = vmatprep.subr.bf16.mxu0 0
    %82 = vmatpush1.bf16.msra.mxu0 0
    %83 = vmatprep.subr.bf16.mxu0 0
    %84 = vmatpush1.bf16.msra.mxu0 0
    %85 = vmatprep.subr.bf16.mxu0 0
    %86 = vmatpush1.bf16.msra.mxu0 0
    %87 = vmatprep.mubr.bf16.mxu0 0
    %88 = vmatmul.mubr.bf16.gmra.mrb[0].mxu0 %v53
    %v89 = vpop.f32.mrb[0].mxu0
    %v90 = vadd.f32 %v37, %v89
    %v91 = vpop.f32.mrb[0].mxu0
    %v92 = vpop.f32.mrb[0].mxu0
    %v93 = vpop.f32.mrb[0].mxu0
    %94 = vdwg.mxu0
    %v95 = vmax.f32 %v90, 0.0
    %v96 = vld [vmem:[%s3] sm:$0x3]
    %v97 = vpack.c.bf16 %v95, %v95
    %v98 = vld [vmem:[%s4] sm:$0xf]
    %100 = vset.pattern.permute.xlu0 0
    %101 = vperm.xlu0 %100, %v98
    %v102 = vpop.permute.xlu0 %101
    %vm104 = vcmask 64512
    %v106 = vsel %vm104, %v96, 0
    %vm108 = vcmask 1043456
    %v110 = vsel %vm108, %v97, 0
    %112 = vmatprep.subr.bf16.mxu0 0
    %113 = vmatpush1.bf16.msra.mxu0 %v110
    %114 = vmatprep.subr.bf16.mxu0 0
    %115 = vmatpush1.bf16.msra.mxu0 0
    %116 = vmatprep.subr.bf16.mxu0 0
    %117 = vmatpush1.bf16.msra.mxu0 0
    %118 = vmatprep.subr.bf16.mxu0 0
    %119 = vmatpush1.bf16.msra.mxu0 0
    %120 = vmatprep.subr.bf16.mxu0 0
    %121 = vmatpush1.bf16.msra.mxu0 0
    %122 = vmatprep.subr.bf16.mxu0 0
    %123 = vmatpush1.bf16.msra.mxu0 0
    %124 = vmatprep.subr.bf16.mxu0 0
    %125 = vmatpush1.bf16.msra.mxu0 0
    %126 = vmatprep.subr.bf16.mxu0 0
    %127 = vmatpush1.bf16.msra.mxu0 0
    %128 = vmatprep.subr.bf16.mxu0 0
    %129 = vmatpush1.bf16.msra.mxu0 0
    %130 = vmatprep.subr.bf16.mxu0 0
    %131 = vmatpush1.bf16.msra.mxu0 0
    %132 = vmatprep.subr.bf16.mxu0 0
    %133 = vmatpush1.bf16.msra.mxu0 0
    %134 = vmatprep.subr.bf16.mxu0 0
    %135 = vmatpush1.bf16.msra.mxu0 0
    %136 = vmatprep.subr.bf16.mxu0 0
    %137 = vmatpush1.bf16.msra.mxu0 0
    %138 = vmatprep.subr.bf16.mxu0 0
    %139 = vmatpush1.bf16.msra.mxu0 0
    %140 = vmatprep.subr.bf16.mxu0 0
    %141 = vmatpush1.bf16.msra.mxu0 0
    %142 = vmatprep.subr.bf16.mxu0 0
    %143 = vmatpush1.bf16.msra.mxu0 0
    %144 = vmatprep.mubr.bf16.mxu0 0
    %145 = vmatmul.mubr.bf16.gmra.mrb[0].mxu0 %v106
    %v146 = vpop.f32.mrb[0].mxu0
    %v147 = vadd.f32 %v102, %v146
    %v148 = vpop.f32.mrb[0].mxu0
    %v149 = vpop.f32.mrb[0].mxu0
    %v150 = vpop.f32.mrb[0].mxu0
    %151 = vdwg.mxu0
    %v152 = vmax.f32 %v147, 0.0
    %v153 = vld [vmem:[%s5] sm:$0xf]
    %v154 = vld [vmem:[%s5 + $0x4] sm:$0xf]
    %v155 = vpack.c.bf16 %v152, %v152
    %v156 = vld [vmem:[%s6] sm:$0xff]
    %v157 = vld [vmem:[%s6 + $0x8] sm:$0xff]
    %159 = vset.pattern.permute.xlu0 0
    %160 = vperm.xlu0 %159, %v156
    %v161 = vpop.permute.xlu0 %160
    %164 = vset.pattern.permute.xlu0 0
    %165 = vperm.xlu0 %164, %v157
    %v166 = vpop.permute.xlu0 %165
    %v170 = vunpack.c.l.b16 %v153
    %v171 = vunpack.c.l.b16 %v154
    %v172 = vpack.c.b16 %v171, %v170
    %vm173 = vcmask 31744
    %v175 = vsel %vm173, %v172, 0
    %vm177 = vcmask 1041408
    %v179 = vsel %vm177, %v155, 0
    %181 = vmatprep.subr.bf16.mxu0 0
    %182 = vmatpush1.bf16.msra.mxu0 %v179
    %183 = vmatprep.subr.bf16.mxu0 0
    %184 = vmatpush1.bf16.msra.mxu0 0
    %185 = vmatprep.subr.bf16.mxu0 0
    %186 = vmatpush1.bf16.msra.mxu0 0
    %187 = vmatprep.subr.bf16.mxu0 0
    %188 = vmatpush1.bf16.msra.mxu0 0
    %189 = vmatprep.subr.bf16.mxu0 0
    %190 = vmatpush1.bf16.msra.mxu0 0
    %191 = vmatprep.subr.bf16.mxu0 0
    %192 = vmatpush1.bf16.msra.mxu0 0
    %193 = vmatprep.subr.bf16.mxu0 0
    %194 = vmatpush1.bf16.msra.mxu0 0
    %195 = vmatprep.subr.bf16.mxu0 0
    %196 = vmatpush1.bf16.msra.mxu0 0
    %197 = vmatprep.subr.bf16.mxu0 0
    %198 = vmatpush1.bf16.msra.mxu0 0
    %199 = vmatprep.subr.bf16.mxu0 0
    %200 = vmatpush1.bf16.msra.mxu0 0
    %201 = vmatprep.subr.bf16.mxu0 0
    %202 = vmatpush1.bf16.msra.mxu0 0
    %203 = vmatprep.subr.bf16.mxu0 0
    %204 = vmatpush1.bf16.msra.mxu0 0
    %205 = vmatprep.subr.bf16.mxu0 0
    %206 = vmatpush1.bf16.msra.mxu0 0
    %207 = vmatprep.subr.bf16.mxu0 0
    %208 = vmatpush1.bf16.msra.mxu0 0
    %209 = vmatprep.subr.bf16.mxu0 0
    %210 = vmatpush1.bf16.msra.mxu0 0
    %211 = vmatprep.subr.bf16.mxu0 0
    %212 = vmatpush1.bf16.msra.mxu0 0
    %213 = vmatprep.mubr.bf16.mxu0 0
    %214 = vmatmul.mubr.bf16.gmra.mrb[0].mxu0 %v175
    %v215 = vpop.f32.mrb[0].mxu0
    %v216 = vadd.f32 %v161, %v215
    %v217 = vpop.f32.mrb[0].mxu0
    %v218 = vpop.f32.mrb[0].mxu0
    %v219 = vadd.f32 %v166, %v218
    %v220 = vpop.f32.mrb[0].mxu0
    %221 = vdwg.mxu0
    %222 = vst [vmem:[#allocation2] sm:$0xff] %v216
    %223 = vst [vmem:[#allocation2 + $0x8] sm:$0xff] %v219
    // Predicated region
    $region30: #{tpu_custom_call.1} parent=1 // pred_check
      _
    $region31: #{tpu_custom_call.1} parent=1 // pred_check_branch
      %225 = sbr.rel (0) target = $region33
    $region32: #{tpu_custom_call.1} parent=1 // pred_region
      %s227 = ssub.s32 256, 256
      %228 = vsyncadd [#allocation3], %s227
      %s229 = sshll.u32 [#allocation2], 4
      %s230 = int_to_ptr.vmem [resolvable:$true] %s229
      %235 = dma.vmem_to_hbm [thread:$0]  %s230, 256, %s7, [#allocation3], 128, 128, 8
    $region33: #{tpu_custom_call.1} parent=1 // pred_fallthru
      _
    // Predicated region
    $region34: #{tpu_custom_call.1} parent=1 // pred_check
      _
    $region35: #{tpu_custom_call.1} parent=1 // pred_check_branch
      %237 = sbr.rel (0) target = $region37
    $region36: #{tpu_custom_call.1} parent=1 // pred_region
      %238 = dma.done [#allocation3], 256
    $region37: #{tpu_custom_call.1} parent=1 // pred_fallthru
      _
    %239 = vsyncpa [#allocation3], 1

</llo_original>
